<compile_context>
chip_gen: v7x
topology: tpu7x:2x2x1
jax: 0.10.0
libtpu: 0.0.40
codegen_flags: <defaults>
</compile_context>

<pallas_src>
import functools
import numpy as np

import jax
import jax.numpy as jnp
from jax import lax
from jax.experimental import pallas as pl
from jax.experimental.pallas import tpu as pltpu


def _round_up(x: int, m: int) -> int:
    return ((x + m - 1) // m) * m


# ---------------------------------------------------------------------------
# Kernels
# ---------------------------------------------------------------------------
def _eql_kernel_single_k(x_ref, w_ref, *rest, scale, scale_bias, use_bias):
    """gk == 1 fast path: one MXU pass per output tile, no accumulator scratch."""
    if use_bias:
        b_ref, o_ref = rest
    else:
        (o_ref,) = rest
        b_ref = None
    # weight stays in (out, in) layout; MXU contracts the transposed RHS natively.
    out = lax.dot_general(
        x_ref[...], w_ref[...],
        dimension_numbers=(((1,), (1,)), ((), ())),
        preferred_element_type=jnp.float32) * scale
    if use_bias:
        out = out + b_ref[...].astype(jnp.float32) * scale_bias  # (1, tn) broadcast
    o_ref[...] = out.astype(o_ref.dtype)


def _eql_kernel_multi_k(x_ref, w_ref, *rest, scale, scale_bias, use_bias):
    """K-tiled path: persistent f32 accumulator, pl.when init / finalize."""
    if use_bias:
        b_ref, o_ref, acc_ref = rest
    else:
        o_ref, acc_ref = rest
        b_ref = None
    k = pl.program_id(2)

    @pl.when(k == 0)
    def _():
        acc_ref[...] = jnp.zeros_like(acc_ref)

    acc_ref[...] += lax.dot_general(
        x_ref[...], w_ref[...],
        dimension_numbers=(((1,), (1,)), ((), ())),
        preferred_element_type=jnp.float32)

    @pl.when(k == pl.num_programs(2) - 1)
    def _():
        out = acc_ref[...] * scale   # hoisted equalized-lr scale (once, not per K)
        if use_bias:
            out = out + b_ref[...].astype(jnp.float32) * scale_bias
        o_ref[...] = out.astype(o_ref.dtype)


# ---------------------------------------------------------------------------
# Wrapper
# ---------------------------------------------------------------------------
def equalized_linear(x, weight, bias=None, *, compute_dtype=None,
                     tm=256, tn=256, tk=1024,
                     max_resident_weight_bytes=4 * 1024 * 1024):
    """x: (..., in_ch); weight: (out_ch, in_ch); bias: (out_ch,) or None."""
    orig_shape = x.shape
    in_ch = orig_shape[-1]
    out_ch, in_w = weight.shape
    assert in_w == in_ch, (in_w, in_ch)

    out_dtype = x.dtype
    M = int(np.prod(orig_shape[:-1])) if len(orig_shape) > 1 else 1
    x2 = x.reshape(M, in_ch)

    # Upstream reduced-precision cast (halves operand HBM bytes, keeps the
    # per-K-step VPU convert out of the kernel).  Accumulation stays f32.
    if compute_dtype is not None:
        x2 = x2.astype(compute_dtype)
        weight = weight.astype(compute_dtype)
    op_dtype = x2.dtype
    itemsize = jnp.dtype(op_dtype).itemsize

    use_bias = bias is not None
    scale = float(np.sqrt(2.0) / np.sqrt(in_ch))
    scale_bias = float(np.sqrt(2.0) / np.sqrt(out_ch))

    # --------------------- tile selection (never full-extent fallback) ------
    k_min = _round_up(in_ch, 128)    # lane-aligned K
    n_min = _round_up(out_ch, 128)   # lane-dense output channels

    # Keep the whole (padded) weight VMEM-resident when it is small: a single
    # (tn, tk) = (n_min, k_min) block whose index_map is constant across the
    # grid is DMA'd from HBM exactly once per call.
    if (n_min * k_min * itemsize <= max_resident_weight_bytes
            and n_min <= 2048 and k_min <= 2048):
        tn_, tk_ = n_min, k_min
    else:
        tn_ = min(tn, n_min)
        tk_ = min(tk, k_min)

    tm_ = min(tm, _round_up(M, 8))

    M_pad = _round_up(M, tm_)
    N_pad = _round_up(out_ch, tn_)
    K_pad = _round_up(in_ch, tk_)
    gm, gn, gk = M_pad // tm_, N_pad // tn_, K_pad // tk_

    # --------------------- wrapper-side zero padding -------------------------
    if (M_pad, K_pad) != (M, in_ch):
        x2 = jnp.pad(x2, ((0, M_pad - M), (0, K_pad - in_ch)))
    w2 = weight
    if (N_pad, K_pad) != (out_ch, in_ch):
        w2 = jnp.pad(w2, ((0, N_pad - out_ch), (0, K_pad - in_ch)))
    if use_bias:
        b2 = bias if N_pad == out_ch else jnp.pad(bias, ((0, N_pad - out_ch),))
        b2 = b2.reshape(1, N_pad)

    # --------------------- cost estimate / compiler params -------------------
    flops = 2 * M * out_ch * in_ch
    bytes_accessed = itemsize * (M * in_ch + out_ch * in_ch) \
        + jnp.dtype(out_dtype).itemsize * M * out_ch
    if use_bias:
        bytes_accessed += 4 * out_ch
    cost = pl.CostEstimate(flops=flops, transcendentals=0,
                           bytes_accessed=int(bytes_accessed))

    cparams = pltpu.CompilerParams(
        dimension_semantics=(("parallel", "parallel") if gk == 1
                             else ("parallel", "parallel", "arbitrary")),
        # Explicit budget: generous on v5e/v6e (128 MiB VMEM), still leaves
        # headroom for compiler scratch on v7x (64 MiB physical).
        vmem_limit_bytes=48 * 1024 * 1024)

    # --------------------- build grid spec -----------------------------------
    if gk == 1:
        kernel = functools.partial(_eql_kernel_single_k, scale=scale,
                                   scale_bias=scale_bias, use_bias=use_bias)
        in_specs = [
            pl.BlockSpec((tm_, K_pad), lambda i, j: (i, 0)),   # x tile
            pl.BlockSpec((tn_, K_pad), lambda i, j: (j, 0)),   # weight (out,in) tile
        ]
        if use_bias:
            in_specs.append(pl.BlockSpec((1, tn_), lambda i, j: (0, j)))
        grid_spec = pltpu.PrefetchScalarGridSpec(
            num_scalar_prefetch=0,
            grid=(gm, gn),
            in_specs=in_specs,
            out_specs=pl.BlockSpec((tm_, tn_), lambda i, j: (i, j)),
            scratch_shapes=[])
    else:
        kernel = functools.partial(_eql_kernel_multi_k, scale=scale,
                                   scale_bias=scale_bias, use_bias=use_bias)
        in_specs = [
            pl.BlockSpec((tm_, tk_), lambda i, j, k: (i, k)),  # x tile
            pl.BlockSpec((tn_, tk_), lambda i, j, k: (j, k)),  # weight (out,in) tile
        ]
        if use_bias:
            in_specs.append(pl.BlockSpec((1, tn_), lambda i, j, k: (0, j)))
        grid_spec = pltpu.PrefetchScalarGridSpec(
            num_scalar_prefetch=0,
            grid=(gm, gn, gk),
            in_specs=in_specs,
            out_specs=pl.BlockSpec((tm_, tn_), lambda i, j, k: (i, j)),
            scratch_shapes=[pltpu.VMEM((tm_, tn_), jnp.float32)])

    args = (x2, w2) + ((b2,) if use_bias else ())
    out2 = pl.pallas_call(
        kernel,
        out_shape=jax.ShapeDtypeStruct((M_pad, N_pad), out_dtype),
        grid_spec=grid_spec,
        compiler_params=cparams,
        cost_estimate=cost,
    )(*args)

    out2 = out2[:M, :out_ch]
    if len(orig_shape) == 1:
        return out2.reshape(out_ch)
    return out2.reshape(*orig_shape[:-1], out_ch)


# ---------------------------------------------------------------------------
# Self-test
# ---------------------------------------------------------------------------
if __name__ == "__main__":
    key = jax.random.PRNGKey(0)
    k_x, k_w, k_b, k_x2, k_x3, k_w3 = jax.random.split(key, 6)

    # --- 3D input (batch, seq, hidden) with bias, OUT not lane-aligned ------
    B, S, IN, OUT = 2, 8, 32, 64
    x = jax.random.normal(k_x, (B, S, IN), dtype=jnp.float32)
    weight = jax.random.normal(k_w, (OUT, IN), dtype=jnp.float32)   # nn.init.normal_
    bias = jax.random.normal(k_b, (OUT,), dtype=jnp.float32)

    out = jax.block_until_ready(equalized_linear(x, weight, bias))

    scale = np.sqrt(2.0) / np.sqrt(IN)
    scale_bias = np.sqrt(2.0) / np.sqrt(OUT)
    ref = np.asarray(x) @ (np.asarray(weight) * scale).T \
        + (np.asarray(bias) * scale_bias)[None, None, :]
    assert out.shape == (B, S, OUT), out.shape
    np.testing.assert_allclose(np.asarray(out), ref, rtol=1e-5, atol=1e-5)

    # --- 2D input, no bias ----------------------------------------------------
    x2d = jax.random.normal(k_x2, (4, IN), dtype=jnp.float32)
    out2 = jax.block_until_ready(equalized_linear(x2d, weight, None))
    ref2 = np.asarray(x2d) @ (np.asarray(weight) * scale).T
    assert out2.shape == (4, OUT), out2.shape
    np.testing.assert_allclose(np.asarray(out2), ref2, rtol=1e-5, atol=1e-5)

    # --- exercise the K-tiled (multi-K) kernel path ---------------------------
    IN3, OUT3 = 256, 128
    x3 = jax.random.normal(k_x3, (2, 8, IN3), dtype=jnp.float32)
    w3 = jax.random.normal(k_w3, (OUT3, IN3), dtype=jnp.float32)
    b3 = jax.random.normal(k_b, (OUT3,), dtype=jnp.float32)
    out3 = jax.block_until_ready(
        equalized_linear(x3, w3, b3, tn=128, tk=128,
                         max_resident_weight_bytes=0))   # force gk=2 path
    s3 = np.sqrt(2.0) / np.sqrt(IN3)
    sb3 = np.sqrt(2.0) / np.sqrt(OUT3)
    ref3 = np.asarray(x3) @ (np.asarray(w3) * s3).T \
        + (np.asarray(b3) * sb3)[None, None, :]
    assert out3.shape == (2, 8, OUT3), out3.shape
    np.testing.assert_allclose(np.asarray(out3), ref3, rtol=1e-4, atol=1e-4)

    print("KERNEL_OK")
</pallas_src>

<mosaic_0001>
module attributes {stable_mosaic.version = 11 : i64} {
  func.func @_eql_kernel_single_k(%arg0: i32, %arg1: i32, %arg2: memref<16x128xf32, #tpu.memory_space<vmem>>, %arg3: memref<128x128xf32, #tpu.memory_space<vmem>>, %arg4: memref<1x128xf32, #tpu.memory_space<vmem>>, %arg5: memref<16x128xf32, #tpu.memory_space<vmem>>) attributes {dimension_semantics = [#tpu.dimension_semantics<parallel>, #tpu.dimension_semantics<parallel>], iteration_bounds = array<i64: 1, 1>, scalar_prefetch = 0 : i64, scratch_operands = 0 : i64, tpu.core_type = #tpu.core_type<tc>, window_params = [{transform_indices = @transform_0, window_bounds = array<i64: 16, 128>}, {transform_indices = @transform_1, window_bounds = array<i64: 128, 128>}, {transform_indices = @transform_2, window_bounds = array<i64: 1, 128>}, {transform_indices = @transform_3, window_bounds = array<i64: 16, 128>}]} {
    %c0 = arith.constant 0 : index
    %c0_0 = arith.constant 0 : index
    %0 = vector.load %arg2[%c0, %c0_0] : memref<16x128xf32, #tpu.memory_space<vmem>>, vector<16x128xf32>
    %c0_1 = arith.constant 0 : index
    %c0_2 = arith.constant 0 : index
    %1 = vector.load %arg3[%c0_1, %c0_2] : memref<128x128xf32, #tpu.memory_space<vmem>>, vector<128x128xf32>
    %cst = arith.constant dense<0.000000e+00> : vector<16x128xf32>
    %2 = tpu.matmul %0, %1, %cst {dimension_numbers = #tpu.dot_dimension_numbers<[1], [1], [0], [0], [0, 0, 1, 0], [], []>} : vector<16x128xf32>, vector<128x128xf32>, vector<16x128xf32> -> vector<16x128xf32>
    %cst_3 = arith.constant 2.500000e-01 : f32
    %3 = vector.broadcast %cst_3 : f32 to vector<16x128xf32>
    %4 = arith.mulf %2, %3 : vector<16x128xf32>
    %c0_4 = arith.constant 0 : index
    %c0_5 = arith.constant 0 : index
    %5 = vector.load %arg4[%c0_4, %c0_5] : memref<1x128xf32, #tpu.memory_space<vmem>>, vector<1x128xf32>
    %cst_6 = arith.constant 0.176776692 : f32
    %6 = vector.broadcast %cst_6 : f32 to vector<1x128xf32>
    %7 = arith.mulf %5, %6 : vector<1x128xf32>
    %8 = vector.broadcast %7 : vector<1x128xf32> to vector<16x128xf32>
    %9 = arith.addf %4, %8 : vector<16x128xf32>
    %c0_7 = arith.constant 0 : index
    %c0_8 = arith.constant 0 : index
    %10 = vector.load %arg5[%c0_7, %c0_8] : memref<16x128xf32, #tpu.memory_space<vmem>>, vector<16x128xf32>
    tpu.vector_store %arg5[%c0_7, %c0_8], %9 {strides = array<i32>} : memref<16x128xf32, #tpu.memory_space<vmem>>, vector<16x128xf32>,
    return
  }
  func.func @transform_0(%arg0: i32, %arg1: i32) -> (i32, i32) {
    %c0_i32 = arith.constant 0 : i32
    %c0_i32_0 = arith.constant 0 : i32
    return %arg0, %c0_i32 : i32, i32
  }
  func.func @transform_1(%arg0: i32, %arg1: i32) -> (i32, i32) {
    %c0_i32 = arith.constant 0 : i32
    %c0_i32_0 = arith.constant 0 : i32
    return %arg1, %c0_i32 : i32, i32
  }
  func.func @transform_2(%arg0: i32, %arg1: i32) -> (i32, i32) {
    %c0_i32 = arith.constant 0 : i32
    %c0_i32_0 = arith.constant 0 : i32
    return %c0_i32, %arg1 : i32, i32
  }
  func.func @transform_3(%arg0: i32, %arg1: i32) -> (i32, i32) {
    %c0_i32 = arith.constant 0 : i32
    return %arg0, %arg1 : i32, i32
  }
}

</mosaic_0001>

<llo_original>
// kernel: tpu_custom_call.1
$region0: #{tpu_custom_call.1}
  #allocation0 [shape = 'u32[]', space=smem, size = 0x4, offset = 0x4, fixed_abs, tag = 'smem constant byte address 0x4 - core index']
  #allocation1 [shape = 'u32[144,128]{1,0:T(1,128)}', space=vmem, size = 0x12000, scoped, tag = 'internal scratch']
  %s0 = inlined_call_operand.hbm [shape: f32[16,128], index: 0, kind: input, shape index: {}]
  %s1 = inlined_call_operand.hbm [shape: f32[128,128], index: 1, kind: input, shape index: {}]
  %s2 = inlined_call_operand.vmem [shape: f32[1,128], index: 2, kind: input, shape index: {}]
  %s3 = inlined_call_operand.hbm [shape: f32[16,128], index: 3, kind: output, shape index: {}]
  %s4 = sld [smem:[#allocation0]]
  $region30: #{tpu_custom_call.1} parent=0
    _
  %s6 = ssub.s32 1, %s4
  %s7 = scalar_select 0, %s6, %s4
  $region1: #{tpu_custom_call.1} parent=0
    #allocation2 [shape = 'u8[8192]{0}', space=vmem, size = 0x2000, scoped, tag = 'input window, operand 0, single buffered']
    #allocation3 [shape = 's32[1]{0}', space=sflag, size = 0x4, scoped, tag = 'scoped memory for tpu_custom_call.1']
    #allocation4 [shape = 's32[1]{0}', space=sflag, size = 0x4, scoped, tag = 'scoped memory for tpu_custom_call.1']
    #allocation5 [shape = 'u8[65536]{0}', space=vmem, size = 0x10000, scoped, tag = 'input window, operand 1, single buffered']
    #allocation6 [shape = 's32[1]{0}', space=sflag, size = 0x4, scoped, tag = 'scoped memory for tpu_custom_call.1']
    #allocation7 [shape = 'u8[8192]{0}', space=vmem, size = 0x2000, scoped, tag = 'output window, operand 0, single buffered']
    %8 = vsyncpa [#allocation3], 0
    %9 = vsyncpa [#allocation6], 0
    %10 = vsyncpa [#allocation4], 0
    // Predicated region
    $region2: #{tpu_custom_call.1} parent=1 // pred_check
      _
    $region3: #{tpu_custom_call.1} parent=1 // pred_check_branch
      %12 = sbr.rel (0) target = $region5
    $region4: #{tpu_custom_call.1} parent=1 // pred_region
      %s14 = ssub.s32 256, 256
      %15 = vsyncadd [#allocation3], %s14
      %s16 = sshll.u32 [#allocation2], 4
      %s17 = int_to_ptr.vmem [resolvable:$true] %s16
      %22 = dma.hbm_to_vmem [thread:$0]  %s0, 256, %s17, [#allocation3], 128, 128, 8
    $region5: #{tpu_custom_call.1} parent=1 // pred_fallthru
      _
    // Predicated region
    $region6: #{tpu_custom_call.1} parent=1 // pred_check
      _
    $region7: #{tpu_custom_call.1} parent=1 // pred_check_branch
      %24 = sbr.rel (0) target = $region9
    $region8: #{tpu_custom_call.1} parent=1 // pred_region
      %s26 = ssub.s32 2048, 2048
      %27 = vsyncadd [#allocation6], %s26
      %s28 = sshll.u32 [#allocation5], 4
      %s29 = int_to_ptr.vmem [resolvable:$true] %s28
      %34 = dma.hbm_to_vmem [thread:$0]  %s1, 2048, %s29, [#allocation6], 128, 128, 8
    $region9: #{tpu_custom_call.1} parent=1 // pred_fallthru
      _
    // Predicated region
    $region10: #{tpu_custom_call.1} parent=1 // pred_check
      _
    $region11: #{tpu_custom_call.1} parent=1 // pred_check_branch
      %36 = sbr.rel (0) target = $region13
    $region12: #{tpu_custom_call.1} parent=1 // pred_region
      _
    $region13: #{tpu_custom_call.1} parent=1 // pred_fallthru
      _
    // Predicated region
    $region14: #{tpu_custom_call.1} parent=1 // pred_check
      _
    $region15: #{tpu_custom_call.1} parent=1 // pred_check_branch
      %38 = sbr.rel (0) target = $region17
    $region16: #{tpu_custom_call.1} parent=1 // pred_region
      %39 = dma.done [#allocation3], 256
    $region17: #{tpu_custom_call.1} parent=1 // pred_fallthru
      _
    // Predicated region
    $region18: #{tpu_custom_call.1} parent=1 // pred_check
      _
    $region19: #{tpu_custom_call.1} parent=1 // pred_check_branch
      %41 = sbr.rel (0) target = $region21
    $region20: #{tpu_custom_call.1} parent=1 // pred_region
      %42 = dma.done [#allocation6], 2048
    $region21: #{tpu_custom_call.1} parent=1 // pred_fallthru
      _
    %v43 = vld [vmem:[#allocation2] sm:$0xff]
    %v44 = vld [vmem:[#allocation2 + $0x8] sm:$0xff]
    %v45 = vld [vmem:[#allocation5] sm:$0xff]
    %v46 = vld [vmem:[#allocation5 + $0x8] sm:$0xff]
    %v47 = vld [vmem:[#allocation5 + $0x10] sm:$0xff]
    %v48 = vld [vmem:[#allocation5 + $0x18] sm:$0xff]
    %v49 = vld [vmem:[#allocation5 + $0x20] sm:$0xff]
    %v50 = vld [vmem:[#allocation5 + $0x28] sm:$0xff]
    %v51 = vld [vmem:[#allocation5 + $0x30] sm:$0xff]
    %v52 = vld [vmem:[#allocation5 + $0x38] sm:$0xff]
    %v53 = vld [vmem:[#allocation5 + $0x40] sm:$0xff]
    %v54 = vld [vmem:[#allocation5 + $0x48] sm:$0xff]
    %v55 = vld [vmem:[#allocation5 + $0x50] sm:$0xff]
    %v56 = vld [vmem:[#allocation5 + $0x58] sm:$0xff]
    %v57 = vld [vmem:[#allocation5 + $0x60] sm:$0xff]
    %v58 = vld [vmem:[#allocation5 + $0x68] sm:$0xff]
    %v59 = vld [vmem:[#allocation5 + $0x70] sm:$0xff]
    %v60 = vld [vmem:[#allocation5 + $0x78] sm:$0xff]
    %61 = vmatprep.subr.mxu0 0.0
    %62 = vmatpush1.xpose.msra.mxu0 %v45
    %63 = vmatprep.subr.mxu0 0.0
    %64 = vmatpush1.xpose.msra.mxu0 %v46
    %65 = vmatprep.subr.mxu0 0.0
    %66 = vmatpush1.xpose.msra.mxu0 %v47
    %67 = vmatprep.subr.mxu0 0.0
    %68 = vmatpush1.xpose.msra.mxu0 %v48
    %69 = vmatprep.subr.mxu0 0.0
    %70 = vmatpush1.xpose.msra.mxu0 %v49
    %71 = vmatprep.subr.mxu0 0.0
    %72 = vmatpush1.xpose.msra.mxu0 %v50
    %73 = vmatprep.subr.mxu0 0.0
    %74 = vmatpush1.xpose.msra.mxu0 %v51
    %75 = vmatprep.subr.mxu0 0.0
    %76 = vmatpush1.xpose.msra.mxu0 %v52
    %77 = vmatprep.subr.mxu0 0.0
    %78 = vmatpush1.xpose.msra.mxu0 %v53
    %79 = vmatprep.subr.mxu0 0.0
    %80 = vmatpush1.xpose.msra.mxu0 %v54
    %81 = vmatprep.subr.mxu0 0.0
    %82 = vmatpush1.xpose.msra.mxu0 %v55
    %83 = vmatprep.subr.mxu0 0.0
    %84 = vmatpush1.xpose.msra.mxu0 %v56
    %85 = vmatprep.subr.mxu0 0.0
    %86 = vmatpush1.xpose.msra.mxu0 %v57
    %87 = vmatprep.subr.mxu0 0.0
    %88 = vmatpush1.xpose.msra.mxu0 %v58
    %89 = vmatprep.subr.mxu0 0.0
    %90 = vmatpush1.xpose.msra.mxu0 %v59
    %91 = vmatprep.subr.mxu0 0.0
    %92 = vmatpush1.xpose.msra.mxu0 %v60
    %93 = vmatprep.subr.mxu0 0.0
    %94 = vmatpush1.xpose.msra.mxu0 0.0
    %95 = vmatprep.subr.mxu0 0.0
    %96 = vmatpush1.xpose.msra.mxu0 0.0
    %97 = vmatprep.subr.mxu0 0.0
    %98 = vmatpush1.xpose.msra.mxu0 0.0
    %99 = vmatprep.subr.mxu0 0.0
    %100 = vmatpush1.xpose.msra.mxu0 0.0
    %101 = vmatprep.subr.mxu0 0.0
    %102 = vmatpush1.xpose.msra.mxu0 0.0
    %103 = vmatprep.subr.mxu0 0.0
    %104 = vmatpush1.xpose.msra.mxu0 0.0
    %105 = vmatprep.subr.mxu0 0.0
    %106 = vmatpush1.xpose.msra.mxu0 0.0
    %107 = vmatprep.subr.mxu0 0.0
    %108 = vmatpush1.xpose.msra.mxu0 0.0
    %109 = vmatprep.subr.mxu0 0.0
    %110 = vmatpush1.xpose.msra.mxu0 0.0
    %111 = vmatprep.subr.mxu0 0.0
    %112 = vmatpush1.xpose.msra.mxu0 0.0
    %113 = vmatprep.subr.mxu0 0.0
    %114 = vmatpush1.xpose.msra.mxu0 0.0
    %115 = vmatprep.subr.mxu0 0.0
    %116 = vmatpush1.xpose.msra.mxu0 0.0
    %117 = vmatprep.subr.mxu0 0.0
    %118 = vmatpush1.xpose.msra.mxu0 0.0
    %119 = vmatprep.subr.mxu0 0.0
    %120 = vmatpush1.xpose.msra.mxu0 0.0
    %121 = vmatprep.subr.mxu0 0.0
    %122 = vmatpush1.xpose.msra.mxu0 0.0
    %123 = vmatprep.subr.mxu0 0.0
    %124 = vmatpush1.xpose.msra.mxu0 0.0
    %125 = vmatprep.mubr.f32.mxu0 0.0
    %126 = vmatmul.mubr.f32.gmra.mrb[0].mxu0 %v43
    %v127 = vpop.f32.mrb[0].mxu0
    %v128 = vadd.f32 0.0, %v127
    %v129 = vpop.f32.mrb[0].mxu0
    %130 = vmatprep.mubr.f32.mxu0 0.0
    %131 = vmatmul.mubr.f32.gmra.mrb[0].mxu0 %v44
    %v132 = vpop.f32.mrb[0].mxu0
    %v133 = vadd.f32 0.0, %v132
    %v134 = vpop.f32.mrb[0].mxu0
    %135 = vdwg.mxu0
    %v136 = vmul.f32 %v128, 0.25
    %v137 = vmul.f32 %v133, 0.25
    %v138 = vld [vmem:[%s2] sm:$0x1]
    %v139 = vmul.f32 %v138, 0.17677669
    %v141 = vlaneseq
    %v142 = vshrl.u32 %v141, 7
    %v143 = vsub.s32 0, %v142
    %v144 = vrot.slane %v139, %v143
    %v146 = vadd.f32 %v136, %v144
    %v147 = vadd.f32 %v137, %v144
    %148 = vst [vmem:[#allocation7] sm:$0xff] %v146
    %149 = vst [vmem:[#allocation7 + $0x8] sm:$0xff] %v147
    // Predicated region
    $region22: #{tpu_custom_call.1} parent=1 // pred_check
      _
    $region23: #{tpu_custom_call.1} parent=1 // pred_check_branch
      %151 = sbr.rel (0) target = $region25
    $region24: #{tpu_custom_call.1} parent=1 // pred_region
      %s153 = ssub.s32 256, 256
      %154 = vsyncadd [#allocation4], %s153
      %s155 = sshll.u32 [#allocation7], 4
      %s156 = int_to_ptr.vmem [resolvable:$true] %s155
      %161 = dma.vmem_to_hbm [thread:$0]  %s156, 256, %s3, [#allocation4], 128, 128, 8
    $region25: #{tpu_custom_call.1} parent=1 // pred_fallthru
      _
    // Predicated region
    $region26: #{tpu_custom_call.1} parent=1 // pred_check
      _
    $region27: #{tpu_custom_call.1} parent=1 // pred_check_branch
      %163 = sbr.rel (0) target = $region29
    $region28: #{tpu_custom_call.1} parent=1 // pred_region
      %164 = dma.done [#allocation4], 256
    $region29: #{tpu_custom_call.1} parent=1 // pred_fallthru
      _
    %165 = vsyncpa [#allocation3], 1
    %166 = vsyncpa [#allocation6], 1
    %167 = vsyncpa [#allocation4], 1

</llo_original>
